<compile_context>
chip_gen: v7x
topology: tpu7x:2x2x1
jax: 0.10.0
libtpu: 0.0.40
codegen_flags: <defaults>
</compile_context>

<pallas_src>
import functools
import math

import jax
import jax.numpy as jnp
from jax import lax
from jax.experimental import pallas as pl
from jax.experimental.pallas import tpu as pltpu

_SQRT_HALF = 0.7071067811865475       # 1/sqrt(2)
_SQRT_2_OVER_PI = 0.7978845608028654  # sqrt(2/pi), tanh-approx GELU constant


def _compat_kernel(logits_ref, compat_ref, shared_ref,
                   w1_ref, b1_ref, g_ref, beta_ref, w2_ref, b2_ref,
                   out_ref, *, approximate_gelu):
    # ---- softmax over base vocab with deferred normalization ----
    logits = logits_ref[...].astype(jnp.float32)
    m = jnp.max(logits, axis=-1, keepdims=True)
    e = jnp.exp(logits - m)
    z = jnp.sum(e, axis=-1, keepdims=True)

    # exp @ compatibility_matrix on the MXU, then exact 1/Z scale (EUP path,
    # (TM, 1) column -> negligible cost, closer parity with torch's divide).
    bias = jnp.dot(e, compat_ref[...].astype(jnp.float32),
                   preferred_element_type=jnp.float32)
    bias = bias * pl.reciprocal(z, approx=False)

    # ---- compatibility_predictor MLP on shared features ----
    x = shared_ref[...].astype(jnp.float32)
    h = jnp.dot(x, w1_ref[...].astype(jnp.float32),
                preferred_element_type=jnp.float32) + b1_ref[...]

    # LayerNorm (eps = 1e-5, elementwise affine)
    mu = jnp.mean(h, axis=-1, keepdims=True)
    var = jnp.mean((h - mu) * (h - mu), axis=-1, keepdims=True)
    hn = (h - mu) * lax.rsqrt(var + 1e-5)
    hn = hn * g_ref[...] + beta_ref[...]

    if approximate_gelu:
        # Opt-in tanh-approx GELU: transcendental lands on the EUP slot
        # instead of a ~15-op VPU erf polynomial at 16/128 lane occupancy.
        inner = _SQRT_2_OVER_PI * (hn + 0.044715 * hn * hn * hn)
        act = 0.5 * hn * (1.0 + jnp.tanh(inner))
    else:
        # Exact (erf) GELU, matching torch.nn.GELU default.  Dropout(0.1) is
        # identity in eval mode.
        act = 0.5 * hn * (1.0 + lax.erf(hn * _SQRT_HALF))

    add = jnp.dot(act, w2_ref[...].astype(jnp.float32),
                  preferred_element_type=jnp.float32) + b2_ref[...]

    out_ref[...] = (bias + add).astype(out_ref.dtype)


def _round_up(x, m):
    return ((x + m - 1) // m) * m


def character_diacritic_compatibility(base_logits, compat_matrix,
                                      shared_features, params,
                                      *, block_tokens=8192,
                                      approximate_gelu=False):
    """Fused Pallas forward.

    base_logits:     [B, S, Vb]   (f32 or bf16)
    compat_matrix:   [Vb, Vd]
    shared_features: [B, S, D]    (f32 or bf16)
    params: w1 [D, H], b1 [1, H], ln_g [1, H], ln_b [1, H], w2 [H, Vd], b2 [1, Vd]
    Returns (compatibility_bias [B, S, Vd] f32, compat_matrix).
    """
    B, S, Vb = base_logits.shape
    Vd = compat_matrix.shape[1]
    D = shared_features.shape[-1]
    H = params["w1"].shape[1]
    M = B * S

    logits2d = base_logits.reshape(M, Vb)
    shared2d = shared_features.reshape(M, D)

    # Token-axis tile:
    #   * large (default 8192) so per-grid-step pipeline overhead (~0.35 us)
    #     is amortized against the ~192 B/token of HBM traffic,
    #   * but capped so large M still gives >= ~8 grid steps (several tiles
    #     per v7x TensorCore for "parallel" sharding + pipelining),
    #   * never below 1024 tokens (overhead floor),
    #   * multiple of 16 (covers bf16 (16,128) sublane packing), or the full
    #     token extent for small problems (full-extent blocks are always
    #     layout-legal).
    # At TM=8192 the double-buffered streams are ~3 MiB total plus a few MiB
    # of in-body f32 temporaries — far below even v7x's 32 MiB scoped VMEM.
    TM = min(block_tokens, max(1024, _round_up(pl.cdiv(M, 8), 16)))
    if TM >= M:
        TM = M  # single full-extent block; no wrapper-side padding needed.

    # No jnp.pad: grid covers M with a (possibly) ragged final tile.  All
    # per-row math is independent, so undefined values in the out-of-bounds
    # rows of the last tile only affect rows whose stores Pallas discards.
    grid = (pl.cdiv(M, TM),)

    kernel = functools.partial(_compat_kernel, approximate_gelu=approximate_gelu)

    out = pl.pallas_call(
        kernel,
        out_shape=jax.ShapeDtypeStruct((M, Vd), jnp.float32),
        grid=grid,
        in_specs=[
            pl.BlockSpec((TM, Vb), lambda i: (i, 0)),   # streamed logits
            pl.BlockSpec((Vb, Vd), lambda i: (0, 0)),   # resident params
            pl.BlockSpec((TM, D), lambda i: (i, 0)),    # streamed shared feats
            pl.BlockSpec((D, H), lambda i: (0, 0)),
            pl.BlockSpec((1, H), lambda i: (0, 0)),
            pl.BlockSpec((1, H), lambda i: (0, 0)),
            pl.BlockSpec((1, H), lambda i: (0, 0)),
            pl.BlockSpec((H, Vd), lambda i: (0, 0)),
            pl.BlockSpec((1, Vd), lambda i: (0, 0)),
        ],
        out_specs=pl.BlockSpec((TM, Vd), lambda i: (i, 0)),
        compiler_params=pltpu.CompilerParams(
            dimension_semantics=("parallel",)),   # megacore sharding on v7x
    )(logits2d, compat_matrix, shared2d,
      params["w1"], params["b1"], params["ln_g"], params["ln_b"],
      params["w2"], params["b2"])

    out = out.reshape(B, S, Vd)
    return out, compat_matrix


def _reference(base_logits, compat_matrix, shared_features, params):
    probs = jax.nn.softmax(base_logits.astype(jnp.float32), axis=-1)
    bias = jnp.einsum("bsv,vd->bsd", probs, compat_matrix.astype(jnp.float32))
    h = shared_features.astype(jnp.float32) @ params["w1"] + params["b1"]
    mu = jnp.mean(h, axis=-1, keepdims=True)
    var = jnp.mean((h - mu) ** 2, axis=-1, keepdims=True)
    hn = (h - mu) / jnp.sqrt(var + 1e-5) * params["ln_g"] + params["ln_b"]
    act = 0.5 * hn * (1.0 + lax.erf(hn / jnp.sqrt(2.0)))
    add = act @ params["w2"] + params["b2"]
    return bias + add


if __name__ == "__main__":
    # Small shapes consistent with the forward signature.
    B, S = 2, 8
    base_vocab = 32          # base_vocab_size
    diac_vocab = 16          # diacritic_vocab_size
    shared_dim = 32          # shared_dim (enables compatibility_predictor)
    hidden = shared_dim // 2

    key = jax.random.PRNGKey(0)
    k = jax.random.split(key, 8)

    # Deterministic parameter init (synthetic; mirrors shapes from __init__).
    compat_matrix = (jax.random.normal(k[0], (base_vocab, diac_vocab),
                                       dtype=jnp.float32) * 0.01)
    params = {
        "w1": jax.random.normal(k[1], (shared_dim, hidden), jnp.float32)
              * (1.0 / math.sqrt(shared_dim)),
        "b1": jax.random.normal(k[2], (1, hidden), jnp.float32) * 0.01,
        "ln_g": jnp.ones((1, hidden), jnp.float32),
        "ln_b": jnp.zeros((1, hidden), jnp.float32),
        "w2": jax.random.normal(k[3], (hidden, diac_vocab), jnp.float32)
              * (1.0 / math.sqrt(hidden)),
        "b2": jax.random.normal(k[4], (1, diac_vocab), jnp.float32) * 0.01,
    }

    # Streamed activations kept in bf16 (halves input HBM bytes); all
    # element-wise math inside the kernel is still done in f32 (v5e has no
    # bf16 VPU/EUP path).
    base_logits = jax.random.normal(
        k[5], (B, S, base_vocab), jnp.float32).astype(jnp.bfloat16)
    shared_features = jax.random.normal(
        k[6], (B, S, shared_dim), jnp.float32).astype(jnp.bfloat16)

    # TODO(synk): training-mode `direct_term` (0.001 * relu(W).mean()) and
    # Dropout randomness are omitted — inference semantics are implemented.
    compat_bias, compat_out = character_diacritic_compatibility(
        base_logits, compat_matrix, shared_features, params)
    jax.block_until_ready(compat_bias)

    ref = _reference(base_logits, compat_matrix, shared_features, params)
    assert compat_bias.shape == (B, S, diac_vocab)
    assert compat_out.shape == (base_vocab, diac_vocab)
    assert jnp.allclose(compat_bias, ref, atol=1e-3, rtol=1e-3), (
        float(jnp.max(jnp.abs(compat_bias - ref))))

    print("KERNEL_OK")
</pallas_src>

<mosaic_0001>
module attributes {stable_mosaic.version = 11 : i64} {
  func.func @_compat_kernel(%arg0: i32, %arg1: memref<16x32xbf16, #tpu.memory_space<vmem>>, %arg2: memref<32x16xf32, #tpu.memory_space<vmem>>, %arg3: memref<16x32xbf16, #tpu.memory_space<vmem>>, %arg4: memref<32x16xf32, #tpu.memory_space<vmem>>, %arg5: memref<1x16xf32, #tpu.memory_space<vmem>>, %arg6: memref<1x16xf32, #tpu.memory_space<vmem>>, %arg7: memref<1x16xf32, #tpu.memory_space<vmem>>, %arg8: memref<16x16xf32, #tpu.memory_space<vmem>>, %arg9: memref<1x16xf32, #tpu.memory_space<vmem>>, %arg10: memref<16x16xf32, #tpu.memory_space<vmem>>) attributes {dimension_semantics = [#tpu.dimension_semantics<parallel>], iteration_bounds = array<i64: 1>, scalar_prefetch = 0 : i64, scratch_operands = 0 : i64, tpu.core_type = #tpu.core_type<tc>, window_params = [{transform_indices = @transform_0, window_bounds = array<i64: 16, 32>}, {pipeline_mode = #tpu.pipeline_mode<synchronous>, transform_indices = @transform_1, window_bounds = array<i64: 32, 16>}, {transform_indices = @transform_2, window_bounds = array<i64: 16, 32>}, {pipeline_mode = #tpu.pipeline_mode<synchronous>, transform_indices = @transform_3, window_bounds = array<i64: 32, 16>}, {pipeline_mode = #tpu.pipeline_mode<synchronous>, transform_indices = @transform_4, window_bounds = array<i64: 1, 16>}, {pipeline_mode = #tpu.pipeline_mode<synchronous>, transform_indices = @transform_5, window_bounds = array<i64: 1, 16>}, {pipeline_mode = #tpu.pipeline_mode<synchronous>, transform_indices = @transform_6, window_bounds = array<i64: 1, 16>}, {pipeline_mode = #tpu.pipeline_mode<synchronous>, transform_indices = @transform_7, window_bounds = array<i64: 16, 16>}, {pipeline_mode = #tpu.pipeline_mode<synchronous>, transform_indices = @transform_8, window_bounds = array<i64: 1, 16>}, {transform_indices = @transform_9, window_bounds = array<i64: 16, 16>}]} {
    %c0 = arith.constant 0 : index
    %c0_0 = arith.constant 0 : index
    %0 = vector.load %arg1[%c0, %c0_0] : memref<16x32xbf16, #tpu.memory_space<vmem>>, vector<16x32xbf16>
    %1 = arith.extf %0 : vector<16x32xbf16> to vector<16x32xf32>
    %cst = arith.constant dense<0xFF800000> : vector<16xf32>
    %2 = vector.multi_reduction <maximumf>, %1, %cst [1] : vector<16x32xf32> to vector<16xf32>
    %3 = vector.shape_cast %2 : vector<16xf32> to vector<16x1xf32>
    %4 = vector.broadcast %3 : vector<16x1xf32> to vector<16x32xf32>
    %5 = arith.subf %1, %4 : vector<16x32xf32>
    %6 = math.exp %5 : vector<16x32xf32>
    %cst_1 = arith.constant dense<0.000000e+00> : vector<16xf32>
    %7 = vector.multi_reduction <add>, %6, %cst_1 [1] : vector<16x32xf32> to vector<16xf32>
    %8 = vector.shape_cast %7 : vector<16xf32> to vector<16x1xf32>
    %c0_2 = arith.constant 0 : index
    %c0_3 = arith.constant 0 : index
    %9 = vector.load %arg2[%c0_2, %c0_3] : memref<32x16xf32, #tpu.memory_space<vmem>>, vector<32x16xf32>
    %cst_4 = arith.constant dense<0.000000e+00> : vector<16x16xf32>
    %10 = tpu.matmul %6, %9, %cst_4 {dimension_numbers = #tpu.dot_dimension_numbers<[1], [0], [0], [1], [0, 0, 1, 1], [], []>} : vector<16x32xf32>, vector<32x16xf32>, vector<16x16xf32> -> vector<16x16xf32>
    %11 = tpu.reciprocal %8 : vector<16x1xf32> -> vector<16x1xf32>
    %12 = vector.broadcast %11 : vector<16x1xf32> to vector<16x16xf32>
    %13 = arith.mulf %10, %12 : vector<16x16xf32>
    %c0_5 = arith.constant 0 : index
    %c0_6 = arith.constant 0 : index
    %14 = vector.load %arg3[%c0_5, %c0_6] : memref<16x32xbf16, #tpu.memory_space<vmem>>, vector<16x32xbf16>
    %15 = arith.extf %14 : vector<16x32xbf16> to vector<16x32xf32>
    %c0_7 = arith.constant 0 : index
    %c0_8 = arith.constant 0 : index
    %16 = vector.load %arg4[%c0_7, %c0_8] : memref<32x16xf32, #tpu.memory_space<vmem>>, vector<32x16xf32>
    %cst_9 = arith.constant dense<0.000000e+00> : vector<16x16xf32>
    %17 = tpu.matmul %15, %16, %cst_9 {dimension_numbers = #tpu.dot_dimension_numbers<[1], [0], [0], [1], [0, 0, 1, 1], [], []>} : vector<16x32xf32>, vector<32x16xf32>, vector<16x16xf32> -> vector<16x16xf32>
    %c0_10 = arith.constant 0 : index
    %c0_11 = arith.constant 0 : index
    %18 = vector.load %arg5[%c0_10, %c0_11] : memref<1x16xf32, #tpu.memory_space<vmem>>, vector<1x16xf32>
    %19 = vector.broadcast %18 : vector<1x16xf32> to vector<16x16xf32>
    %20 = arith.addf %17, %19 : vector<16x16xf32>
    %cst_12 = arith.constant dense<0.000000e+00> : vector<16xf32>
    %21 = vector.multi_reduction <add>, %20, %cst_12 [1] : vector<16x16xf32> to vector<16xf32>
    %22 = vector.shape_cast %21 : vector<16xf32> to vector<16x1xf32>
    %cst_13 = arith.constant 1.600000e+01 : f32
    %23 = vector.broadcast %cst_13 : f32 to vector<16x1xf32>
    %24 = arith.divf %22, %23 : vector<16x1xf32>
    %25 = vector.broadcast %24 : vector<16x1xf32> to vector<16x16xf32>
    %26 = arith.subf %20, %25 : vector<16x16xf32>
    %27 = vector.broadcast %24 : vector<16x1xf32> to vector<16x16xf32>
    %28 = arith.subf %20, %27 : vector<16x16xf32>
    %29 = arith.mulf %26, %28 : vector<16x16xf32>
    %cst_14 = arith.constant dense<0.000000e+00> : vector<16xf32>
    %30 = vector.multi_reduction <add>, %29, %cst_14 [1] : vector<16x16xf32> to vector<16xf32>
    %31 = vector.shape_cast %30 : vector<16xf32> to vector<16x1xf32>
    %cst_15 = arith.constant 1.600000e+01 : f32
    %32 = vector.broadcast %cst_15 : f32 to vector<16x1xf32>
    %33 = arith.divf %31, %32 : vector<16x1xf32>
    %34 = vector.broadcast %24 : vector<16x1xf32> to vector<16x16xf32>
    %35 = arith.subf %20, %34 : vector<16x16xf32>
    %cst_16 = arith.constant 9.99999974E-6 : f32
    %36 = vector.broadcast %cst_16 : f32 to vector<16x1xf32>
    %37 = arith.addf %33, %36 : vector<16x1xf32>
    %38 = math.rsqrt %37 : vector<16x1xf32>
    %39 = vector.broadcast %38 : vector<16x1xf32> to vector<16x16xf32>
    %40 = arith.mulf %35, %39 : vector<16x16xf32>
    %c0_17 = arith.constant 0 : index
    %c0_18 = arith.constant 0 : index
    %41 = vector.load %arg6[%c0_17, %c0_18] : memref<1x16xf32, #tpu.memory_space<vmem>>, vector<1x16xf32>
    %42 = vector.broadcast %41 : vector<1x16xf32> to vector<16x16xf32>
    %43 = arith.mulf %40, %42 : vector<16x16xf32>
    %c0_19 = arith.constant 0 : index
    %c0_20 = arith.constant 0 : index
    %44 = vector.load %arg7[%c0_19, %c0_20] : memref<1x16xf32, #tpu.memory_space<vmem>>, vector<1x16xf32>
    %45 = vector.broadcast %44 : vector<1x16xf32> to vector<16x16xf32>
    %46 = arith.addf %43, %45 : vector<16x16xf32>
    %cst_21 = arith.constant 5.000000e-01 : f32
    %47 = vector.broadcast %cst_21 : f32 to vector<16x16xf32>
    %48 = arith.mulf %47, %46 : vector<16x16xf32>
    %cst_22 = arith.constant 0.707106769 : f32
    %49 = vector.broadcast %cst_22 : f32 to vector<16x16xf32>
    %50 = arith.mulf %46, %49 : vector<16x16xf32>
    %51 = math.erf %50 : vector<16x16xf32>
    %cst_23 = arith.constant 1.000000e+00 : f32
    %52 = vector.broadcast %cst_23 : f32 to vector<16x16xf32>
    %53 = arith.addf %52, %51 : vector<16x16xf32>
    %54 = arith.mulf %48, %53 : vector<16x16xf32>
    %c0_24 = arith.constant 0 : index
    %c0_25 = arith.constant 0 : index
    %55 = vector.load %arg8[%c0_24, %c0_25] : memref<16x16xf32, #tpu.memory_space<vmem>>, vector<16x16xf32>
    %cst_26 = arith.constant dense<0.000000e+00> : vector<16x16xf32>
    %56 = tpu.matmul %54, %55, %cst_26 {dimension_numbers = #tpu.dot_dimension_numbers<[1], [0], [0], [1], [0, 0, 1, 1], [], []>} : vector<16x16xf32>, vector<16x16xf32>, vector<16x16xf32> -> vector<16x16xf32>
    %c0_27 = arith.constant 0 : index
    %c0_28 = arith.constant 0 : index
    %57 = vector.load %arg9[%c0_27, %c0_28] : memref<1x16xf32, #tpu.memory_space<vmem>>, vector<1x16xf32>
    %58 = vector.broadcast %57 : vector<1x16xf32> to vector<16x16xf32>
    %59 = arith.addf %56, %58 : vector<16x16xf32>
    %60 = arith.addf %13, %59 : vector<16x16xf32>
    %c0_29 = arith.constant 0 : index
    %c0_30 = arith.constant 0 : index
    %61 = vector.load %arg10[%c0_29, %c0_30] : memref<16x16xf32, #tpu.memory_space<vmem>>, vector<16x16xf32>
    tpu.vector_store %arg10[%c0_29, %c0_30], %60 {strides = array<i32>} : memref<16x16xf32, #tpu.memory_space<vmem>>, vector<16x16xf32>,
    return
  }
  func.func @transform_0(%arg0: i32) -> (i32, i32) {
    %c0_i32 = arith.constant 0 : i32
    %c0_i32_0 = arith.constant 0 : i32
    return %arg0, %c0_i32 : i32, i32
  }
  func.func @transform_1(%arg0: i32) -> (i32, i32) {
    %c0_i32 = arith.constant 0 : i32
    %c0_i32_0 = arith.constant 0 : i32
    %c0_i32_1 = arith.constant 0 : i32
    return %c0_i32, %c0_i32_0 : i32, i32
  }
  func.func @transform_2(%arg0: i32) -> (i32, i32) {
    %c0_i32 = arith.constant 0 : i32
    %c0_i32_0 = arith.constant 0 : i32
    return %arg0, %c0_i32 : i32, i32
  }
  func.func @transform_3(%arg0: i32) -> (i32, i32) {
    %c0_i32 = arith.constant 0 : i32
    %c0_i32_0 = arith.constant 0 : i32
    %c0_i32_1 = arith.constant 0 : i32
    return %c0_i32, %c0_i32_0 : i32, i32
  }
  func.func @transform_4(%arg0: i32) -> (i32, i32) {
    %c0_i32 = arith.constant 0 : i32
    %c0_i32_0 = arith.constant 0 : i32
    %c0_i32_1 = arith.constant 0 : i32
    return %c0_i32, %c0_i32_0 : i32, i32
  }
  func.func @transform_5(%arg0: i32) -> (i32, i32) {
    %c0_i32 = arith.constant 0 : i32
    %c0_i32_0 = arith.constant 0 : i32
    %c0_i32_1 = arith.constant 0 : i32
    return %c0_i32, %c0_i32_0 : i32, i32
  }
  func.func @transform_6(%arg0: i32) -> (i32, i32) {
    %c0_i32 = arith.constant 0 : i32
    %c0_i32_0 = arith.constant 0 : i32
    %c0_i32_1 = arith.constant 0 : i32
    return %c0_i32, %c0_i32_0 : i32, i32
  }
  func.func @transform_7(%arg0: i32) -> (i32, i32) {
    %c0_i32 = arith.constant 0 : i32
    %c0_i32_0 = arith.constant 0 : i32
    %c0_i32_1 = arith.constant 0 : i32
    return %c0_i32, %c0_i32_0 : i32, i32
  }
  func.func @transform_8(%arg0: i32) -> (i32, i32) {
    %c0_i32 = arith.constant 0 : i32
    %c0_i32_0 = arith.constant 0 : i32
    %c0_i32_1 = arith.constant 0 : i32
    return %c0_i32, %c0_i32_0 : i32, i32
  }
  func.func @transform_9(%arg0: i32) -> (i32, i32) {
    %c0_i32 = arith.constant 0 : i32
    %c0_i32_0 = arith.constant 0 : i32
    return %arg0, %c0_i32 : i32, i32
  }
}

</mosaic_0001>

<llo_original>
// kernel: tpu_custom_call.1
$region0: #{tpu_custom_call.1}
  #allocation0 [shape = 'u32[]', space=smem, size = 0x4, offset = 0x4, fixed_abs, tag = 'smem constant byte address 0x4 - core index']
  #allocation1 [shape = 'u32[144,128]{1,0:T(1,128)}', space=vmem, size = 0x12000, scoped, tag = 'internal scratch']
  %s0 = inlined_call_operand.vmem [shape: bf16[16,32], index: 0, kind: input, shape index: {}]
  %s1 = inlined_call_operand.vmem [shape: f32[32,16], index: 1, kind: input, shape index: {}]
  %s2 = inlined_call_operand.vmem [shape: bf16[16,32], index: 2, kind: input, shape index: {}]
  %s3 = inlined_call_operand.vmem [shape: f32[32,16], index: 3, kind: input, shape index: {}]
  %s4 = inlined_call_operand.vmem [shape: f32[1,16], index: 4, kind: input, shape index: {}]
  %s5 = inlined_call_operand.vmem [shape: f32[1,16], index: 5, kind: input, shape index: {}]
  %s6 = inlined_call_operand.vmem [shape: f32[1,16], index: 6, kind: input, shape index: {}]
  %s7 = inlined_call_operand.vmem [shape: f32[16,16], index: 7, kind: input, shape index: {}]
  %s8 = inlined_call_operand.vmem [shape: f32[1,16], index: 8, kind: input, shape index: {}]
  %s9 = inlined_call_operand.hbm [shape: f32[16,16], index: 9, kind: output, shape index: {}]
  %s10 = sld [smem:[#allocation0]]
  $region46: #{tpu_custom_call.1} parent=0
    _
  %s12 = ssub.s32 1, %s10
  %s13 = scalar_select 0, %s12, %s10
  $region1: #{tpu_custom_call.1} parent=0
    #allocation2 [shape = 'u8[8192]{0}', space=vmem, size = 0x2000, scoped, tag = 'output window, operand 0, single buffered']
    #allocation3 [shape = 's32[1]{0}', space=sflag, size = 0x4, scoped, tag = 'scoped memory for tpu_custom_call.1']
    %14 = vsyncpa [#allocation3], 0
    // Predicated region
    $region2: #{tpu_custom_call.1} parent=1 // pred_check
      _
    $region3: #{tpu_custom_call.1} parent=1 // pred_check_branch
      %16 = sbr.rel (0) target = $region5
    $region4: #{tpu_custom_call.1} parent=1 // pred_region
      _
    $region5: #{tpu_custom_call.1} parent=1 // pred_fallthru
      _
    // Predicated region
    $region6: #{tpu_custom_call.1} parent=1 // pred_check
      _
    $region7: #{tpu_custom_call.1} parent=1 // pred_check_branch
      %18 = sbr.rel (0) target = $region9
    $region8: #{tpu_custom_call.1} parent=1 // pred_region
      _
    $region9: #{tpu_custom_call.1} parent=1 // pred_fallthru
      _
    // Predicated region
    $region10: #{tpu_custom_call.1} parent=1 // pred_check
      _
    $region11: #{tpu_custom_call.1} parent=1 // pred_check_branch
      %20 = sbr.rel (0) target = $region13
    $region12: #{tpu_custom_call.1} parent=1 // pred_region
      _
    $region13: #{tpu_custom_call.1} parent=1 // pred_fallthru
      _
    // Predicated region
    $region14: #{tpu_custom_call.1} parent=1 // pred_check
      _
    $region15: #{tpu_custom_call.1} parent=1 // pred_check_branch
      %22 = sbr.rel (0) target = $region17
    $region16: #{tpu_custom_call.1} parent=1 // pred_region
      _
    $region17: #{tpu_custom_call.1} parent=1 // pred_fallthru
      _
    // Predicated region
    $region18: #{tpu_custom_call.1} parent=1 // pred_check
      _
    $region19: #{tpu_custom_call.1} parent=1 // pred_check_branch
      %24 = sbr.rel (0) target = $region21
    $region20: #{tpu_custom_call.1} parent=1 // pred_region
      _
    $region21: #{tpu_custom_call.1} parent=1 // pred_fallthru
      _
    // Predicated region
    $region22: #{tpu_custom_call.1} parent=1 // pred_check
      _
    $region23: #{tpu_custom_call.1} parent=1 // pred_check_branch
      %26 = sbr.rel (0) target = $region25
    $region24: #{tpu_custom_call.1} parent=1 // pred_region
      _
    $region25: #{tpu_custom_call.1} parent=1 // pred_fallthru
      _
    // Predicated region
    $region26: #{tpu_custom_call.1} parent=1 // pred_check
      _
    $region27: #{tpu_custom_call.1} parent=1 // pred_check_branch
      %28 = sbr.rel (0) target = $region29
    $region28: #{tpu_custom_call.1} parent=1 // pred_region
      _
    $region29: #{tpu_custom_call.1} parent=1 // pred_fallthru
      _
    // Predicated region
    $region30: #{tpu_custom_call.1} parent=1 // pred_check
      _
    $region31: #{tpu_custom_call.1} parent=1 // pred_check_branch
      %30 = sbr.rel (0) target = $region33
    $region32: #{tpu_custom_call.1} parent=1 // pred_region
      _
    $region33: #{tpu_custom_call.1} parent=1 // pred_fallthru
      _
    // Predicated region
    $region34: #{tpu_custom_call.1} parent=1 // pred_check
      _
    $region35: #{tpu_custom_call.1} parent=1 // pred_check_branch
      %32 = sbr.rel (0) target = $region37
    $region36: #{tpu_custom_call.1} parent=1 // pred_region
      _
    $region37: #{tpu_custom_call.1} parent=1 // pred_fallthru
      _
    %v33 = vld [vmem:[%s0] sm:$0xf]
    %v34 = vld [vmem:[%s0 + $0x4] sm:$0xf]
    %v35 = vunpack.c.l.bf16 %v33
    %v36 = vunpack.c.l.bf16 %v34
    %vm37 = vcmask 261120
    %v38 = vsel %vm37, %v35, -inf
    %39 = vmax.xlane.f32.xlu0 %v38
    %v40 = vpop.xlane.xlu0 %39
    %v41 = vsel %vm37, %v36, -inf
    %42 = vmax.xlane.f32.xlu0 %v41
    %v43 = vpop.xlane.xlu0 %42
    %v44 = vsub.f32 %v35, %v40
    %v45 = vsub.f32 %v36, %v43
    %v46 = vmul.f32 %v44, 1.442695
    %v47 = vpow.pop %v46
    %v48 = vmul.f32 %v45, 1.442695
    %v49 = vpow.pop %v48
    %v50 = vsel %vm37, %v47, 0.0
    %51 = vadd.xlane.f32.xlu0 %v50
    %v52 = vpop.xlane.xlu0 %51
    %v53 = vsel %vm37, %v49, 0.0
    %54 = vadd.xlane.f32.xlu0 %v53
    %v55 = vpop.xlane.xlu0 %54
    %v56 = vld [vmem:[%s1] sm:$0xff]
    %v57 = vld [vmem:[%s1 + $0x8] sm:$0xff]
    %v58 = vld [vmem:[%s1 + $0x10] sm:$0xff]
    %v59 = vld [vmem:[%s1 + $0x18] sm:$0xff]
    %v61 = vsel %vm37, %v47, 0
    %v64 = vsel %vm37, %v49, 0
    %66 = vmatprep.subr.mxu0 0.0
    %67 = vmatpush1.msra.mxu0 %v56
    %68 = vmatprep.subr.mxu0 0.0
    %69 = vmatpush1.msra.mxu0 %v57
    %70 = vmatprep.subr.mxu0 0.0
    %71 = vmatpush1.msra.mxu0 %v58
    %72 = vmatprep.subr.mxu0 0.0
    %73 = vmatpush1.msra.mxu0 %v59
    %74 = vmatprep.subr.mxu0 0.0
    %75 = vmatpush1.msra.mxu0 0.0
    %76 = vmatprep.subr.mxu0 0.0
    %77 = vmatpush1.msra.mxu0 0.0
    %78 = vmatprep.subr.mxu0 0.0
    %79 = vmatpush1.msra.mxu0 0.0
    %80 = vmatprep.subr.mxu0 0.0
    %81 = vmatpush1.msra.mxu0 0.0
    %82 = vmatprep.subr.mxu0 0.0
    %83 = vmatpush1.msra.mxu0 0.0
    %84 = vmatprep.subr.mxu0 0.0
    %85 = vmatpush1.msra.mxu0 0.0
    %86 = vmatprep.subr.mxu0 0.0
    %87 = vmatpush1.msra.mxu0 0.0
    %88 = vmatprep.subr.mxu0 0.0
    %89 = vmatpush1.msra.mxu0 0.0
    %90 = vmatprep.subr.mxu0 0.0
    %91 = vmatpush1.msra.mxu0 0.0
    %92 = vmatprep.subr.mxu0 0.0
    %93 = vmatpush1.msra.mxu0 0.0
    %94 = vmatprep.subr.mxu0 0.0
    %95 = vmatpush1.msra.mxu0 0.0
    %96 = vmatprep.subr.mxu0 0.0
    %97 = vmatpush1.msra.mxu0 0.0
    %98 = vmatprep.subr.mxu0 0.0
    %99 = vmatpush1.msra.mxu0 0.0
    %100 = vmatprep.subr.mxu0 0.0
    %101 = vmatpush1.msra.mxu0 0.0
    %102 = vmatprep.subr.mxu0 0.0
    %103 = vmatpush1.msra.mxu0 0.0
    %104 = vmatprep.subr.mxu0 0.0
    %105 = vmatpush1.msra.mxu0 0.0
    %106 = vmatprep.subr.mxu0 0.0
    %107 = vmatpush1.msra.mxu0 0.0
    %108 = vmatprep.subr.mxu0 0.0
    %109 = vmatpush1.msra.mxu0 0.0
    %110 = vmatprep.subr.mxu0 0.0
    %111 = vmatpush1.msra.mxu0 0.0
    %112 = vmatprep.subr.mxu0 0.0
    %113 = vmatpush1.msra.mxu0 0.0
    %114 = vmatprep.subr.mxu0 0.0
    %115 = vmatpush1.msra.mxu0 0.0
    %116 = vmatprep.subr.mxu0 0.0
    %117 = vmatpush1.msra.mxu0 0.0
    %118 = vmatprep.subr.mxu0 0.0
    %119 = vmatpush1.msra.mxu0 0.0
    %120 = vmatprep.subr.mxu0 0.0
    %121 = vmatpush1.msra.mxu0 0.0
    %122 = vmatprep.subr.mxu0 0.0
    %123 = vmatpush1.msra.mxu0 0.0
    %124 = vmatprep.subr.mxu0 0.0
    %125 = vmatpush1.msra.mxu0 0.0
    %126 = vmatprep.subr.mxu0 0.0
    %127 = vmatpush1.msra.mxu0 0.0
    %128 = vmatprep.subr.mxu0 0.0
    %129 = vmatpush1.msra.mxu0 0.0
    %130 = vmatprep.mubr.f32.mxu0 0.0
    %131 = vmatmul.mubr.f32.gmra.mrb[0].mxu0 %v61
    %v132 = vpop.f32.mrb[0].mxu0
    %v133 = vadd.f32 0.0, %v132
    %v134 = vpop.f32.mrb[0].mxu0
    %135 = vmatprep.mubr.f32.mxu0 0.0
    %136 = vmatmul.mubr.f32.gmra.mrb[0].mxu0 %v64
    %v137 = vpop.f32.mrb[0].mxu0
    %v138 = vadd.f32 0.0, %v137
    %v139 = vpop.f32.mrb[0].mxu0
    %140 = vdwg.mxu0
    %v141 = vrcp.pop %v52
    %v142 = vrcp.pop %v55
    %v143 = vmul.f32 %v133, %v141
    %v144 = vmul.f32 %v138, %v142
    %v145 = vld [vmem:[%s2] sm:$0xf]
    %v146 = vld [vmem:[%s2 + $0x4] sm:$0xf]
    %v147 = vunpack.c.l.bf16 %v145
    %v148 = vunpack.c.l.bf16 %v146
    %v149 = vld [vmem:[%s3] sm:$0xff]
    %v150 = vld [vmem:[%s3 + $0x8] sm:$0xff]
    %v151 = vld [vmem:[%s3 + $0x10] sm:$0xff]
    %v152 = vld [vmem:[%s3 + $0x18] sm:$0xff]
    %v153 = vld [vmem:[%s4] sm:$0x1]
    %v155 = vlaneseq
    %v156 = vshrl.u32 %v155, 7
    %v157 = vsub.s32 0, %v156
    %v158 = vrot.slane %v153, %v157
    %v161 = vsel %vm37, %v147, 0
    %v164 = vsel %vm37, %v148, 0
    %166 = vmatprep.subr.mxu0 0.0
    %167 = vmatpush1.msra.mxu0 %v149
    %168 = vmatprep.subr.mxu0 0.0
    %169 = vmatpush1.msra.mxu0 %v150
    %170 = vmatprep.subr.mxu0 0.0
    %171 = vmatpush1.msra.mxu0 %v151
    %172 = vmatprep.subr.mxu0 0.0
    %173 = vmatpush1.msra.mxu0 %v152
    %174 = vmatprep.subr.mxu0 0.0
    %175 = vmatpush1.msra.mxu0 0.0
    %176 = vmatprep.subr.mxu0 0.0
    %177 = vmatpush1.msra.mxu0 0.0
    %178 = vmatprep.subr.mxu0 0.0
    %179 = vmatpush1.msra.mxu0 0.0
    %180 = vmatprep.subr.mxu0 0.0
    %181 = vmatpush1.msra.mxu0 0.0
    %182 = vmatprep.subr.mxu0 0.0
    %183 = vmatpush1.msra.mxu0 0.0
    %184 = vmatprep.subr.mxu0 0.0
    %185 = vmatpush1.msra.mxu0 0.0
    %186 = vmatprep.subr.mxu0 0.0
    %187 = vmatpush1.msra.mxu0 0.0
    %188 = vmatprep.subr.mxu0 0.0
    %189 = vmatpush1.msra.mxu0 0.0
    %190 = vmatprep.subr.mxu0 0.0
    %191 = vmatpush1.msra.mxu0 0.0
    %192 = vmatprep.subr.mxu0 0.0
    %193 = vmatpush1.msra.mxu0 0.0
    %194 = vmatprep.subr.mxu0 0.0
    %195 = vmatpush1.msra.mxu0 0.0
    %196 = vmatprep.subr.mxu0 0.0
    %197 = vmatpush1.msra.mxu0 0.0
    %198 = vmatprep.subr.mxu0 0.0
    %199 = vmatpush1.msra.mxu0 0.0
    %200 = vmatprep.subr.mxu0 0.0
    %201 = vmatpush1.msra.mxu0 0.0
    %202 = vmatprep.subr.mxu0 0.0
    %203 = vmatpush1.msra.mxu0 0.0
    %204 = vmatprep.subr.mxu0 0.0
    %205 = vmatpush1.msra.mxu0 0.0
    %206 = vmatprep.subr.mxu0 0.0
    %207 = vmatpush1.msra.mxu0 0.0
    %208 = vmatprep.subr.mxu0 0.0
    %209 = vmatpush1.msra.mxu0 0.0
    %210 = vmatprep.subr.mxu0 0.0
    %211 = vmatpush1.msra.mxu0 0.0
    %212 = vmatprep.subr.mxu0 0.0
    %213 = vmatpush1.msra.mxu0 0.0
    %214 = vmatprep.subr.mxu0 0.0
    %215 = vmatpush1.msra.mxu0 0.0
    %216 = vmatprep.subr.mxu0 0.0
    %217 = vmatpush1.msra.mxu0 0.0
    %218 = vmatprep.subr.mxu0 0.0
    %219 = vmatpush1.msra.mxu0 0.0
    %220 = vmatprep.subr.mxu0 0.0
    %221 = vmatpush1.msra.mxu0 0.0
    %222 = vmatprep.subr.mxu0 0.0
    %223 = vmatpush1.msra.mxu0 0.0
    %224 = vmatprep.subr.mxu0 0.0
    %225 = vmatpush1.msra.mxu0 0.0
    %226 = vmatprep.subr.mxu0 0.0
    %227 = vmatpush1.msra.mxu0 0.0
    %228 = vmatprep.subr.mxu0 0.0
    %229 = vmatpush1.msra.mxu0 0.0
    %230 = vmatprep.mubr.f32.mxu0 0.0
    %231 = vmatmul.mubr.f32.gmra.mrb[0].mxu0 %v161
    %v232 = vpop.f32.mrb[0].mxu0
    %v233 = vadd.f32 %v158, %v232
    %v234 = vpop.f32.mrb[0].mxu0
    %235 = vmatprep.mubr.f32.mxu0 0.0
    %236 = vmatmul.mubr.f32.gmra.mrb[0].mxu0 %v164
    %v237 = vpop.f32.mrb[0].mxu0
    %v238 = vadd.f32 %v158, %v237
    %v239 = vpop.f32.mrb[0].mxu0
    %240 = vdwg.mxu0
    %vm241 = vcmask 130048
    %v242 = vsel %vm241, %v233, 0.0
    %243 = vadd.xlane.f32.xlu0 %v242
    %v244 = vpop.xlane.xlu0 %243
    %v245 = vsel %vm241, %v238, 0.0
    %246 = vadd.xlane.f32.xlu0 %v245
    %v247 = vpop.xlane.xlu0 %246
    %v248 = vrcp.pop 16.0
    %v249 = vmul.f32 %v244, %v248
    %v250 = vmul.f32 %v247, %v248
    %v251 = vsub.f32 %v233, %v249
    %v252 = vsub.f32 %v238, %v250
    %v253 = vmul.f32 %v251, %v251
    %v254 = vmul.f32 %v252, %v252
    %v255 = vsel %vm241, %v253, 0.0
    %256 = vadd.xlane.f32.xlu0 %v255
    %v257 = vpop.xlane.xlu0 %256
    %v258 = vsel %vm241, %v254, 0.0
    %259 = vadd.xlane.f32.xlu0 %v258
    %v260 = vpop.xlane.xlu0 %259
    %v261 = vmul.f32 %v257, %v248
    %v262 = vmul.f32 %v260, %v248
    %v263 = vadd.f32 %v261, 1e-05
    %v264 = vadd.f32 %v262, 1e-05
    %v265 = vrsqrt.pop %v263
    %v266 = vrsqrt.pop %v264
    %v267 = vmul.f32 %v251, %v265
    %v268 = vmul.f32 %v252, %v266
    %v269 = vld [vmem:[%s5] sm:$0x1]
    %v271 = vlaneseq
    %v272 = vshrl.u32 %v271, 7
    %v273 = vsub.s32 0, %v272
    %v274 = vrot.slane %v269, %v273
    %v276 = vmul.f32 %v267, %v274
    %v277 = vmul.f32 %v268, %v274
    %v278 = vld [vmem:[%s6] sm:$0x1]
    %v280 = vlaneseq
    %v281 = vshrl.u32 %v280, 7
    %v282 = vsub.s32 0, %v281
    %v283 = vrot.slane %v278, %v282
    %v285 = vadd.f32 %v276, %v283
    %v286 = vadd.f32 %v277, %v283
    %v287 = vmul.f32 %v285, 0.5
    %v288 = vmul.f32 %v286, 0.5
    %v289 = vmul.f32 %v285, 0.70710677
    %v290 = vmul.f32 %v286, 0.70710677
    %v291 = verf.f32.pop %v289
    %v292 = verf.f32.pop %v290
    %v293 = vadd.f32 %v291, 1.0
    %v294 = vadd.f32 %v292, 1.0
    %v295 = vmul.f32 %v287, %v293
    %v296 = vmul.f32 %v288, %v294
    %v297 = vld [vmem:[%s7] sm:$0xff]
    %v298 = vld [vmem:[%s7 + $0x8] sm:$0xff]
    %v299 = vld [vmem:[%s8] sm:$0x1]
    %v301 = vlaneseq
    %v302 = vshrl.u32 %v301, 7
    %v303 = vsub.s32 0, %v302
    %v304 = vrot.slane %v299, %v303
    %v307 = vsel %vm241, %v295, 0
    %v310 = vsel %vm241, %v296, 0
    %312 = vmatprep.subr.mxu0 0.0
    %313 = vmatpush1.msra.mxu0 %v297
    %314 = vmatprep.subr.mxu0 0.0
    %315 = vmatpush1.msra.mxu0 %v298
    %316 = vmatprep.subr.mxu0 0.0
    %317 = vmatpush1.msra.mxu0 0.0
    %318 = vmatprep.subr.mxu0 0.0
    %319 = vmatpush1.msra.mxu0 0.0
    %320 = vmatprep.subr.mxu0 0.0
    %321 = vmatpush1.msra.mxu0 0.0
    %322 = vmatprep.subr.mxu0 0.0
    %323 = vmatpush1.msra.mxu0 0.0
    %324 = vmatprep.subr.mxu0 0.0
    %325 = vmatpush1.msra.mxu0 0.0
    %326 = vmatprep.subr.mxu0 0.0
    %327 = vmatpush1.msra.mxu0 0.0
    %328 = vmatprep.subr.mxu0 0.0
    %329 = vmatpush1.msra.mxu0 0.0
    %330 = vmatprep.subr.mxu0 0.0
    %331 = vmatpush1.msra.mxu0 0.0
    %332 = vmatprep.subr.mxu0 0.0
    %333 = vmatpush1.msra.mxu0 0.0
    %334 = vmatprep.subr.mxu0 0.0
    %335 = vmatpush1.msra.mxu0 0.0
    %336 = vmatprep.subr.mxu0 0.0
    %337 = vmatpush1.msra.mxu0 0.0
    %338 = vmatprep.subr.mxu0 0.0
    %339 = vmatpush1.msra.mxu0 0.0
    %340 = vmatprep.subr.mxu0 0.0
    %341 = vmatpush1.msra.mxu0 0.0
    %342 = vmatprep.subr.mxu0 0.0
    %343 = vmatpush1.msra.mxu0 0.0
    %344 = vmatprep.subr.mxu0 0.0
    %345 = vmatpush1.msra.mxu0 0.0
    %346 = vmatprep.subr.mxu0 0.0
    %347 = vmatpush1.msra.mxu0 0.0
    %348 = vmatprep.subr.mxu0 0.0
    %349 = vmatpush1.msra.mxu0 0.0
    %350 = vmatprep.subr.mxu0 0.0
    %351 = vmatpush1.msra.mxu0 0.0
    %352 = vmatprep.subr.mxu0 0.0
    %353 = vmatpush1.msra.mxu0 0.0
    %354 = vmatprep.subr.mxu0 0.0
    %355 = vmatpush1.msra.mxu0 0.0
    %356 = vmatprep.subr.mxu0 0.0
    %357 = vmatpush1.msra.mxu0 0.0
    %358 = vmatprep.subr.mxu0 0.0
    %359 = vmatpush1.msra.mxu0 0.0
    %360 = vmatprep.subr.mxu0 0.0
    %361 = vmatpush1.msra.mxu0 0.0
    %362 = vmatprep.subr.mxu0 0.0
    %363 = vmatpush1.msra.mxu0 0.0
    %364 = vmatprep.subr.mxu0 0.0
    %365 = vmatpush1.msra.mxu0 0.0
    %366 = vmatprep.subr.mxu0 0.0
    %367 = vmatpush1.msra.mxu0 0.0
    %368 = vmatprep.subr.mxu0 0.0
    %369 = vmatpush1.msra.mxu0 0.0
    %370 = vmatprep.subr.mxu0 0.0
    %371 = vmatpush1.msra.mxu0 0.0
    %372 = vmatprep.subr.mxu0 0.0
    %373 = vmatpush1.msra.mxu0 0.0
    %374 = vmatprep.subr.mxu0 0.0
    %375 = vmatpush1.msra.mxu0 0.0
    %376 = vmatprep.mubr.f32.mxu0 0.0
    %377 = vmatmul.mubr.f32.gmra.mrb[0].mxu0 %v307
    %v378 = vpop.f32.mrb[0].mxu0
    %v379 = vadd.f32 %v304, %v378
    %v380 = vpop.f32.mrb[0].mxu0
    %381 = vmatprep.mubr.f32.mxu0 0.0
    %382 = vmatmul.mubr.f32.gmra.mrb[0].mxu0 %v310
    %v383 = vpop.f32.mrb[0].mxu0
    %v384 = vadd.f32 %v304, %v383
    %v385 = vpop.f32.mrb[0].mxu0
    %386 = vdwg.mxu0
    %v387 = vadd.f32 %v143, %v379
    %v388 = vadd.f32 %v144, %v384
    %389 = vst.msk [vmem:[#allocation2] sm:$0xff] %vm241, %v387
    %390 = vst.msk [vmem:[#allocation2 + $0x8] sm:$0xff] %vm241, %v388
    // Predicated region
    $region38: #{tpu_custom_call.1} parent=1 // pred_check
      _
    $region39: #{tpu_custom_call.1} parent=1 // pred_check_branch
      %392 = sbr.rel (0) target = $region41
    $region40: #{tpu_custom_call.1} parent=1 // pred_region
      %s394 = ssub.s32 256, 256
      %395 = vsyncadd [#allocation3], %s394
      %s396 = sshll.u32 [#allocation2], 4
      %s397 = int_to_ptr.vmem [resolvable:$true] %s396
      %402 = dma.vmem_to_hbm [thread:$0]  %s397, 256, %s9, [#allocation3], 128, 128, 8
    $region41: #{tpu_custom_call.1} parent=1 // pred_fallthru
      _
    // Predicated region
    $region42: #{tpu_custom_call.1} parent=1 // pred_check
      _
    $region43: #{tpu_custom_call.1} parent=1 // pred_check_branch
      %404 = sbr.rel (0) target = $region45
    $region44: #{tpu_custom_call.1} parent=1 // pred_region
      %405 = dma.done [#allocation3], 256
    $region45: #{tpu_custom_call.1} parent=1 // pred_fallthru
      _
    %406 = vsyncpa [#allocation3], 1

</llo_original>
